<compile_context>
chip_gen: v5e
topology: v5e:2x2
jax: 0.10.0
libtpu: 0.0.40
codegen_flags: <defaults>
</compile_context>

<pallas_src>
import jax
import jax.numpy as jnp
from jax.experimental import pallas as pl
from jax.experimental.pallas import tpu as pltpu

EPS = 1e-6  # matches the PyTorch module's eps=1e-06


def _round_up(n, m):
    return ((n + m - 1) // m) * m


# -----------------------------------------------------------------------------
# Parameter prep: fold BNs into Linears, pad only hidden widths to 128.
# -----------------------------------------------------------------------------
def fold_and_pad_params(params, *, lane_pad=128, use_bf16=False):
    """Fold every inference-mode BN into the adjacent Linear layer.

    Hidden widths are zero-padded to multiples of `lane_pad` (lane-dense
    intermediates); the network's true input/output dim is left unpadded so the
    wrapper needs no host-side pad/slice passes over x or the output.

    params: {'dense': [(W[in,out], b[1,out]), ...],
             'bn':    [(4, nf) arrays: rows = gamma, beta, mean, var, ...]}
    Returns: list of (W'[in_p, out_p], b'[1, out_p]) per dense layer.
    """
    n_dense = len(params["dense"])
    assert len(params["bn"]) == n_dense + 1

    folded = []
    for i in range(n_dense):
        w0 = params["dense"][i][0].astype(jnp.float32)
        b0 = params["dense"][i][1].astype(jnp.float32).reshape(1, -1)
        w, b = w0, b0

        if i == 0:
            # Fold bn0 into the *input* side of W0/b0:  bn0(x) = x * a0 + c0
            g0, be0, m0, v0 = params["bn"][0].astype(jnp.float32)
            a0 = g0 * jax.lax.rsqrt(v0 + EPS)
            c0 = be0 - m0 * a0
            w = w * a0[:, None]
            b = b + c0[None, :] @ w0

        # Fold bn_{i+1} into the *output* side of W_i/b_i.
        g, be, m, v = params["bn"][i + 1].astype(jnp.float32)
        a = g * jax.lax.rsqrt(v + EPS)
        w = w * a[None, :]
        b = (b - m[None, :]) * a[None, :] + be[None, :]

        folded.append((w, b))

    padded = []
    for i, (w, b) in enumerate(folded):
        in_f, out_f = w.shape
        in_p = _round_up(in_f, lane_pad) if i > 0 else in_f            # x unpadded
        out_p = _round_up(out_f, lane_pad) if i < n_dense - 1 else out_f  # out unpadded
        wp = jnp.zeros((in_p, out_p), jnp.float32).at[:in_f, :out_f].set(w)
        bp = jnp.zeros((1, out_p), jnp.float32).at[:, :out_f].set(b)
        if use_bf16:
            # bf16 shares f32's exponent range, so folding gamma/rsqrt(var+eps)
            # into W cannot overflow; only mantissa precision is reduced.
            # TODO(synk): for trained stats with extreme dynamic range, validate
            # the folded-weight spread before casting.
            wp = wp.astype(jnp.bfloat16)
        padded.append((wp, bp))
    return padded


# -----------------------------------------------------------------------------
# Kernel
# -----------------------------------------------------------------------------
def _make_kernel(n_dense, compute_dtype):
    def kernel(*refs):
        # refs = [x, (W_i, b_i) * n_dense, out]
        x_ref = refs[0]
        o_ref = refs[-1]

        x = x_ref[...]
        if x.dtype != compute_dtype:
            x = x.astype(compute_dtype)
        idx = 1
        for i in range(n_dense):
            w = refs[idx][...]
            b = refs[idx + 1][...]          # f32 bias (kept f32 for v5e VPU)
            idx += 2
            y = jnp.dot(x, w, preferred_element_type=jnp.float32) + b  # MXU
            if i < n_dense - 1:
                y = jnp.maximum(y, 0.0)     # ReLU on all but the last layer
                x = y.astype(compute_dtype)
            else:
                x = y
        o_ref[...] = x.astype(o_ref.dtype)

    return kernel


# -----------------------------------------------------------------------------
# Wrapper
# -----------------------------------------------------------------------------
def feed_forward_subnet(x, params, *, block_batch=1024, lane_pad=128,
                        use_bf16=False, out_dtype=jnp.float32):
    """Fused forward pass of the FeedForwardSubNet (eval-mode BN).

    x:      [B, dim]
    params: see fold_and_pad_params.
    Returns [B, dim] in out_dtype (no padded rows/cols — nothing to slice off).
    """
    B, dim = x.shape
    layers = fold_and_pad_params(params, lane_pad=lane_pad, use_bf16=use_bf16)
    n_dense = len(layers)
    assert layers[0][0].shape[0] == dim          # first layer input unpadded
    dim_out = layers[-1][0].shape[1]             # last layer output unpadded (== dim)

    in_dtype = jnp.bfloat16 if use_bf16 else x.dtype
    if x.dtype != in_dtype:
        x = x.astype(in_dtype)                   # halves streamed-input DMA bytes

    # Batch tile: big enough to amortize the ~0.35us/step overhead, small enough
    # that small batches still make 2 balanced "parallel" steps (v7x 2 TCs).
    sub = 16 if use_bf16 else 8                  # sublane multiple (bf16 packs 16)
    half = _round_up(max(pl.cdiv(B, 2), 1), sub)
    bm = max(sub, min(_round_up(block_batch, sub), half))
    bm = min(bm, _round_up(B, sub))
    grid = (pl.cdiv(B, bm),)                     # Pallas clips the ragged last block

    args = [x]
    in_specs = [pl.BlockSpec((bm, dim), lambda i: (i, 0))]   # x tiled over batch
    for w, b in layers:
        args += [w, b]
        in_specs += [
            pl.BlockSpec(w.shape, lambda i: (0, 0)),   # weights: resident (constant block)
            pl.BlockSpec(b.shape, lambda i: (0, 0)),
        ]
    out_spec = pl.BlockSpec((bm, dim_out), lambda i: (i, 0))

    flops = 2 * B * sum(w.shape[0] * w.shape[1] for w, _ in layers)
    wb_bytes = sum(w.size * w.dtype.itemsize + b.size * b.dtype.itemsize
                   for w, b in layers)
    bytes_accessed = (x.size * x.dtype.itemsize
                      + B * dim_out * jnp.dtype(out_dtype).itemsize
                      + wb_bytes)

    # Honest VMEM budget: double-buffered streamed tiles + (conservatively
    # double-buffered) resident weights/biases + activation-chain headroom.
    x_tile = bm * dim * jnp.dtype(in_dtype).itemsize
    o_tile = bm * dim_out * jnp.dtype(out_dtype).itemsize
    max_w = max(w.shape[1] for w, _ in layers)
    act_bytes = bm * max_w * 4 * (n_dense + 1)
    vmem_need = 2 * (x_tile + o_tile) + 2 * wb_bytes + act_bytes
    vmem_limit = int(min(64 << 20, max(16 << 20, 2 * vmem_need)))

    out = pl.pallas_call(
        _make_kernel(n_dense, jnp.bfloat16 if use_bf16 else jnp.float32),
        out_shape=jax.ShapeDtypeStruct((B, dim_out), out_dtype),
        grid=grid,
        in_specs=in_specs,
        out_specs=out_spec,
        compiler_params=pltpu.CompilerParams(
            dimension_semantics=("parallel",),
            vmem_limit_bytes=vmem_limit,
        ),
        cost_estimate=pl.CostEstimate(
            flops=flops, transcendentals=0, bytes_accessed=bytes_accessed),
    )(*args)

    return out   # already (B, dim) — no slice pass needed


# -----------------------------------------------------------------------------
# Deterministic parameter init mirroring the module's shapes
# -----------------------------------------------------------------------------
def init_params(key, dim, num_hiddens):
    widths = [dim] + list(num_hiddens) + [dim]
    n_dense = len(widths) - 1
    bn_feats = [dim] + list(num_hiddens) + [dim]

    keys = jax.random.split(key, 2 * n_dense + len(bn_feats))
    ki = 0

    dense = []
    for i in range(n_dense):
        fan_in, fan_out = widths[i], widths[i + 1]
        bound = 1.0 / jnp.sqrt(fan_in)
        w = jax.random.uniform(keys[ki], (fan_in, fan_out), jnp.float32, -bound, bound)
        ki += 1
        b = jax.random.uniform(keys[ki], (1, fan_out), jnp.float32, -bound, bound)
        ki += 1
        dense.append((w, b))

    bn = []
    for nf in bn_feats:
        k = keys[ki]
        ki += 1
        kg, kb, km, kv = jax.random.split(k, 4)
        gamma = jax.random.uniform(kg, (nf,), jnp.float32, 0.5, 1.5)
        beta = jax.random.uniform(kb, (nf,), jnp.float32, -0.1, 0.1)
        mean = jax.random.uniform(km, (nf,), jnp.float32, -0.5, 0.5)
        var = jax.random.uniform(kv, (nf,), jnp.float32, 0.5, 1.5)
        bn.append(jnp.stack([gamma, beta, mean, var], axis=0))  # (4, nf)

    return {"dense": dense, "bn": bn}


def reference_forward(x, params):
    """Pure-JAX reference (matches PyTorch eval-mode forward, unfolded)."""
    def bn(x, p):
        return (x - p[2]) / jnp.sqrt(p[3] + EPS) * p[0] + p[1]

    n_dense = len(params["dense"])
    x = bn(x, params["bn"][0])
    for i in range(n_dense):
        w, b = params["dense"][i]
        x = x @ w + b
        x = bn(x, params["bn"][i + 1])
        if i < n_dense - 1:
            x = jnp.maximum(x, 0.0)
    return x


if __name__ == "__main__":
    # Small shapes consistent with the module's config.
    B = 64                  # batch
    DIM = 16                # eqn_config['dim']
    NUM_HIDDENS = [32, 32]  # net_config['num_hiddens']

    key = jax.random.PRNGKey(0)
    kx, kp = jax.random.split(key)
    x = jax.random.normal(kx, (B, DIM), jnp.float32)
    params = init_params(kp, DIM, NUM_HIDDENS)

    ref = reference_forward(x, params)

    # f32 path; B=64 -> 2 balanced parallel steps (one per v7x TensorCore).
    out = feed_forward_subnet(x, params, use_bf16=False)
    out = jax.block_until_ready(out)
    assert out.shape == (B, DIM)
    assert jnp.allclose(out, ref, atol=1e-4, rtol=1e-4), "f32 kernel mismatch"

    # Ragged batch (exercises Pallas clipping of the last partial block).
    Br = 53
    out_r = feed_forward_subnet(x[:Br], params, use_bf16=False)
    out_r = jax.block_until_ready(out_r)
    assert out_r.shape == (Br, DIM)
    assert jnp.allclose(out_r, ref[:Br], atol=1e-4, rtol=1e-4), "ragged kernel mismatch"

    # bf16 matmul + bf16 streamed input (loose check — bf16 mantissa).
    out_bf16 = feed_forward_subnet(x, params, use_bf16=True)
    out_bf16 = jax.block_until_ready(out_bf16)
    assert out_bf16.shape == (B, DIM)
    assert jnp.allclose(out_bf16, ref, atol=1e-1, rtol=1e-1), "bf16 kernel mismatch"

    print("KERNEL_OK")
</pallas_src>

<mosaic_0001>
module attributes {stable_mosaic.version = 11 : i64} {
  func.func @kernel(%arg0: i32, %arg1: memref<32x16xf32, #tpu.memory_space<vmem>>, %arg2: memref<16x128xf32, #tpu.memory_space<vmem>>, %arg3: memref<1x128xf32, #tpu.memory_space<vmem>>, %arg4: memref<128x128xf32, #tpu.memory_space<vmem>>, %arg5: memref<1x128xf32, #tpu.memory_space<vmem>>, %arg6: memref<128x16xf32, #tpu.memory_space<vmem>>, %arg7: memref<1x16xf32, #tpu.memory_space<vmem>>, %arg8: memref<32x16xf32, #tpu.memory_space<vmem>>) attributes {dimension_semantics = [#tpu.dimension_semantics<parallel>], iteration_bounds = array<i64: 2>, scalar_prefetch = 0 : i64, scratch_operands = 0 : i64, tpu.core_type = #tpu.core_type<tc>, window_params = [{transform_indices = @transform_0, window_bounds = array<i64: 32, 16>}, {pipeline_mode = #tpu.pipeline_mode<synchronous>, transform_indices = @transform_1, window_bounds = array<i64: 16, 128>}, {pipeline_mode = #tpu.pipeline_mode<synchronous>, transform_indices = @transform_2, window_bounds = array<i64: 1, 128>}, {pipeline_mode = #tpu.pipeline_mode<synchronous>, transform_indices = @transform_3, window_bounds = array<i64: 128, 128>}, {pipeline_mode = #tpu.pipeline_mode<synchronous>, transform_indices = @transform_4, window_bounds = array<i64: 1, 128>}, {pipeline_mode = #tpu.pipeline_mode<synchronous>, transform_indices = @transform_5, window_bounds = array<i64: 128, 16>}, {pipeline_mode = #tpu.pipeline_mode<synchronous>, transform_indices = @transform_6, window_bounds = array<i64: 1, 16>}, {transform_indices = @transform_7, window_bounds = array<i64: 32, 16>}]} {
    %c0 = arith.constant 0 : index
    %c0_0 = arith.constant 0 : index
    %0 = vector.load %arg1[%c0, %c0_0] : memref<32x16xf32, #tpu.memory_space<vmem>>, vector<32x16xf32>
    %c0_1 = arith.constant 0 : index
    %c0_2 = arith.constant 0 : index
    %1 = vector.load %arg2[%c0_1, %c0_2] : memref<16x128xf32, #tpu.memory_space<vmem>>, vector<16x128xf32>
    %c0_3 = arith.constant 0 : index
    %c0_4 = arith.constant 0 : index
    %2 = vector.load %arg3[%c0_3, %c0_4] : memref<1x128xf32, #tpu.memory_space<vmem>>, vector<1x128xf32>
    %cst = arith.constant dense<0.000000e+00> : vector<32x128xf32>
    %3 = tpu.matmul %0, %1, %cst {dimension_numbers = #tpu.dot_dimension_numbers<[1], [0], [0], [1], [0, 0, 1, 1], [], []>} : vector<32x16xf32>, vector<16x128xf32>, vector<32x128xf32> -> vector<32x128xf32>
    %4 = vector.broadcast %2 : vector<1x128xf32> to vector<32x128xf32>
    %5 = arith.addf %3, %4 : vector<32x128xf32>
    %cst_5 = arith.constant 0.000000e+00 : f32
    %6 = vector.broadcast %cst_5 : f32 to vector<32x128xf32>
    %7 = arith.maximumf %5, %6 : vector<32x128xf32>
    %c0_6 = arith.constant 0 : index
    %c0_7 = arith.constant 0 : index
    %8 = vector.load %arg4[%c0_6, %c0_7] : memref<128x128xf32, #tpu.memory_space<vmem>>, vector<128x128xf32>
    %c0_8 = arith.constant 0 : index
    %c0_9 = arith.constant 0 : index
    %9 = vector.load %arg5[%c0_8, %c0_9] : memref<1x128xf32, #tpu.memory_space<vmem>>, vector<1x128xf32>
    %cst_10 = arith.constant dense<0.000000e+00> : vector<32x128xf32>
    %10 = tpu.matmul %7, %8, %cst_10 {dimension_numbers = #tpu.dot_dimension_numbers<[1], [0], [0], [1], [0, 0, 1, 1], [], []>} : vector<32x128xf32>, vector<128x128xf32>, vector<32x128xf32> -> vector<32x128xf32>
    %11 = vector.broadcast %9 : vector<1x128xf32> to vector<32x128xf32>
    %12 = arith.addf %10, %11 : vector<32x128xf32>
    %cst_11 = arith.constant 0.000000e+00 : f32
    %13 = vector.broadcast %cst_11 : f32 to vector<32x128xf32>
    %14 = arith.maximumf %12, %13 : vector<32x128xf32>
    %c0_12 = arith.constant 0 : index
    %c0_13 = arith.constant 0 : index
    %15 = vector.load %arg6[%c0_12, %c0_13] : memref<128x16xf32, #tpu.memory_space<vmem>>, vector<128x16xf32>
    %c0_14 = arith.constant 0 : index
    %c0_15 = arith.constant 0 : index
    %16 = vector.load %arg7[%c0_14, %c0_15] : memref<1x16xf32, #tpu.memory_space<vmem>>, vector<1x16xf32>
    %cst_16 = arith.constant dense<0.000000e+00> : vector<32x16xf32>
    %17 = tpu.matmul %14, %15, %cst_16 {dimension_numbers = #tpu.dot_dimension_numbers<[1], [0], [0], [1], [0, 0, 1, 1], [], []>} : vector<32x128xf32>, vector<128x16xf32>, vector<32x16xf32> -> vector<32x16xf32>
    %18 = vector.broadcast %16 : vector<1x16xf32> to vector<32x16xf32>
    %19 = arith.addf %17, %18 : vector<32x16xf32>
    %c0_17 = arith.constant 0 : index
    %c0_18 = arith.constant 0 : index
    %20 = vector.load %arg8[%c0_17, %c0_18] : memref<32x16xf32, #tpu.memory_space<vmem>>, vector<32x16xf32>
    tpu.vector_store %arg8[%c0_17, %c0_18], %19 {strides = array<i32>} : memref<32x16xf32, #tpu.memory_space<vmem>>, vector<32x16xf32>,
    return
  }
  func.func @transform_0(%arg0: i32) -> (i32, i32) {
    %c0_i32 = arith.constant 0 : i32
    %c0_i32_0 = arith.constant 0 : i32
    return %arg0, %c0_i32 : i32, i32
  }
  func.func @transform_1(%arg0: i32) -> (i32, i32) {
    %c0_i32 = arith.constant 0 : i32
    %c0_i32_0 = arith.constant 0 : i32
    %c0_i32_1 = arith.constant 0 : i32
    return %c0_i32, %c0_i32_0 : i32, i32
  }
  func.func @transform_2(%arg0: i32) -> (i32, i32) {
    %c0_i32 = arith.constant 0 : i32
    %c0_i32_0 = arith.constant 0 : i32
    %c0_i32_1 = arith.constant 0 : i32
    return %c0_i32, %c0_i32_0 : i32, i32
  }
  func.func @transform_3(%arg0: i32) -> (i32, i32) {
    %c0_i32 = arith.constant 0 : i32
    %c0_i32_0 = arith.constant 0 : i32
    %c0_i32_1 = arith.constant 0 : i32
    return %c0_i32, %c0_i32_0 : i32, i32
  }
  func.func @transform_4(%arg0: i32) -> (i32, i32) {
    %c0_i32 = arith.constant 0 : i32
    %c0_i32_0 = arith.constant 0 : i32
    %c0_i32_1 = arith.constant 0 : i32
    return %c0_i32, %c0_i32_0 : i32, i32
  }
  func.func @transform_5(%arg0: i32) -> (i32, i32) {
    %c0_i32 = arith.constant 0 : i32
    %c0_i32_0 = arith.constant 0 : i32
    %c0_i32_1 = arith.constant 0 : i32
    return %c0_i32, %c0_i32_0 : i32, i32
  }
  func.func @transform_6(%arg0: i32) -> (i32, i32) {
    %c0_i32 = arith.constant 0 : i32
    %c0_i32_0 = arith.constant 0 : i32
    %c0_i32_1 = arith.constant 0 : i32
    return %c0_i32, %c0_i32_0 : i32, i32
  }
  func.func @transform_7(%arg0: i32) -> (i32, i32) {
    %c0_i32 = arith.constant 0 : i32
    %c0_i32_0 = arith.constant 0 : i32
    return %arg0, %c0_i32 : i32, i32
  }
}

</mosaic_0001>

<llo_original>
// kernel: tpu_custom_call.1
$region0: #{tpu_custom_call.1}
  #allocation0 [shape = 'u32[]', space=smem, size = 0x4, offset = 0x4, fixed_abs, tag = 'smem constant byte address 0x4 - core index']
  #allocation1 [shape = 'u32[72,128]{1,0:T(1,128)}', space=vmem, size = 0x9000, scoped, tag = 'internal scratch']
  %s0 = inlined_call_operand.vmem [shape: f32[64,16], index: 0, kind: input, shape index: {}]
  %s1 = inlined_call_operand.vmem [shape: f32[16,128], index: 1, kind: input, shape index: {}]
  %s2 = inlined_call_operand.vmem [shape: f32[1,128], index: 2, kind: input, shape index: {}]
  %s3 = inlined_call_operand.vmem [shape: f32[128,128], index: 3, kind: input, shape index: {}]
  %s4 = inlined_call_operand.vmem [shape: f32[1,128], index: 4, kind: input, shape index: {}]
  %s5 = inlined_call_operand.vmem [shape: f32[128,16], index: 5, kind: input, shape index: {}]
  %s6 = inlined_call_operand.vmem [shape: f32[1,16], index: 6, kind: input, shape index: {}]
  %s7 = inlined_call_operand.vmem [shape: f32[64,16], index: 7, kind: output, shape index: {}]
  %s8 = sld [smem:[#allocation0]]
  $region61: #{tpu_custom_call.1} parent=0
    _
  %s10 = ssub.s32 1, %s8
  %s11 = scalar_select 0, %s10, %s8
  loop: start=0, step=1, limit=4
  $region2: #{tpu_custom_call.1} parent=0 // loop_pre_header
    _
  $region3: #{tpu_custom_call.1} parent=0 // loop_header
    %s13 = sphi 0, %s17
    %p14 = scmp.ge.s32.totalorder %s13, 4
    %s23 = sphi 0, %s25
    %s26 = sphi 0, %s23
    %s27 = sphi 0, %s26
    %s43 = sphi 0, %s27
    %s47 = sphi 0, %s47
    %s49 = sphi 0, %s47
    %s50 = sphi 0, %s49
    %s64 = sphi 0, %s50
    %s68 = sphi 0, %s68
    %s70 = sphi 0, %s68
    %s71 = sphi 0, %s70
    %s85 = sphi 0, %s71
    %s89 = sphi 0, %s89
    %s91 = sphi 0, %s89
    %s92 = sphi 0, %s91
    %s106 = sphi 0, %s92
    %s110 = sphi 0, %s110
    %s112 = sphi 0, %s110
    %s113 = sphi 0, %s112
    %s127 = sphi 0, %s113
    %s131 = sphi 0, %s131
    %s133 = sphi 0, %s131
    %s134 = sphi 0, %s133
    %s148 = sphi 0, %s134
    %s152 = sphi 0, %s152
    %s154 = sphi 0, %s152
    %s155 = sphi 0, %s154
    %s169 = sphi 0, %s155
    %s175 = sphi 0, %s177
    %s178 = sphi 0, %s175
    %s179 = sphi 0, %s178
    %s195 = sphi 0, %s179
  $region4: #{tpu_custom_call.1} parent=0 // loop_header_branch
    %16 = sbr.rel (%p14) target = $region8
  $region5: #{tpu_custom_call.1} parent=0 // loop_body
    %s18 = ssub.s32 %s13, 1
    %s19 = ssub.s32 %s13, 2
    %s20 = sadd.s32 %s13, 1
    %s21 = ssub.s32 %s13, %s20
    %p22 = scmp.eq.s32.totalorder %s21, 0
    %s24 = sadd.s32 %s23, 1
    %s25 = scalar_select %p22, %s23, %s24
    %p28 = pneg %p22
    %p29 = scmp.eq.s32.totalorder %s13, 1
    %p30 = por %p28, %p29
    %p31 = scmp.ne.s32.totalorder %s23, %s26
    %p32 = scmp.eq.s32.totalorder %s13, 0
    %p33 = por %p31, %p32
    %p34 = scmp.ne.s32.totalorder %s23, %s26
    %p35 = scmp.eq.s32.totalorder %s18, 1
    %p36 = por %p34, %p35
    %p37 = scmp.ne.s32.totalorder %s26, %s27
    %p38 = scmp.eq.s32.totalorder %s18, 0
    %p39 = por %p37, %p38
    %p40 = scmp.ne.s32.totalorder %s26, %s27
    %p41 = scmp.eq.s32.totalorder %s19, 1
    %p42 = por %p40, %p41
    %p44 = scmp.ne.s32.totalorder %s27, %s43
    %p45 = scmp.eq.s32.totalorder %s19, 0
    %p46 = por %p44, %p45
    %s48 = sadd.s32 %s47, 1
    %p51 = scmp.eq.s32.totalorder %s13, 1
    %p52 = scmp.ne.s32.totalorder %s47, %s49
    %p53 = scmp.eq.s32.totalorder %s13, 0
    %p54 = por %p52, %p53
    %p55 = scmp.ne.s32.totalorder %s47, %s49
    %p56 = scmp.eq.s32.totalorder %s18, 1
    %p57 = por %p55, %p56
    %p58 = scmp.ne.s32.totalorder %s49, %s50
    %p59 = scmp.eq.s32.totalorder %s18, 0
    %p60 = por %p58, %p59
    %p61 = scmp.ne.s32.totalorder %s49, %s50
    %p62 = scmp.eq.s32.totalorder %s19, 1
    %p63 = por %p61, %p62
    %p65 = scmp.ne.s32.totalorder %s50, %s64
    %p66 = scmp.eq.s32.totalorder %s19, 0
    %p67 = por %p65, %p66
    %s69 = sadd.s32 %s68, 1
    %p72 = scmp.eq.s32.totalorder %s13, 1
    %p73 = scmp.ne.s32.totalorder %s68, %s70
    %p74 = scmp.eq.s32.totalorder %s13, 0
    %p75 = por %p73, %p74
    %p76 = scmp.ne.s32.totalorder %s68, %s70
    %p77 = scmp.eq.s32.totalorder %s18, 1
    %p78 = por %p76, %p77
    %p79 = scmp.ne.s32.totalorder %s70, %s71
    %p80 = scmp.eq.s32.totalorder %s18, 0
    %p81 = por %p79, %p80
    %p82 = scmp.ne.s32.totalorder %s70, %s71
    %p83 = scmp.eq.s32.totalorder %s19, 1
    %p84 = por %p82, %p83
    %p86 = scmp.ne.s32.totalorder %s71, %s85
    %p87 = scmp.eq.s32.totalorder %s19, 0
    %p88 = por %p86, %p87
    %s90 = sadd.s32 %s89, 1
    %p93 = scmp.eq.s32.totalorder %s13, 1
    %p94 = scmp.ne.s32.totalorder %s89, %s91
    %p95 = scmp.eq.s32.totalorder %s13, 0
    %p96 = por %p94, %p95
    %p97 = scmp.ne.s32.totalorder %s89, %s91
    %p98 = scmp.eq.s32.totalorder %s18, 1
    %p99 = por %p97, %p98
    %p100 = scmp.ne.s32.totalorder %s91, %s92
    %p101 = scmp.eq.s32.totalorder %s18, 0
    %p102 = por %p100, %p101
    %p103 = scmp.ne.s32.totalorder %s91, %s92
    %p104 = scmp.eq.s32.totalorder %s19, 1
    %p105 = por %p103, %p104
    %p107 = scmp.ne.s32.totalorder %s92, %s106
    %p108 = scmp.eq.s32.totalorder %s19, 0
    %p109 = por %p107, %p108
    %s111 = sadd.s32 %s110, 1
    %p114 = scmp.eq.s32.totalorder %s13, 1
    %p115 = scmp.ne.s32.totalorder %s110, %s112
    %p116 = scmp.eq.s32.totalorder %s13, 0
    %p117 = por %p115, %p116
    %p118 = scmp.ne.s32.totalorder %s110, %s112
    %p119 = scmp.eq.s32.totalorder %s18, 1
    %p120 = por %p118, %p119
    %p121 = scmp.ne.s32.totalorder %s112, %s113
    %p122 = scmp.eq.s32.totalorder %s18, 0
    %p123 = por %p121, %p122
    %p124 = scmp.ne.s32.totalorder %s112, %s113
    %p125 = scmp.eq.s32.totalorder %s19, 1
    %p126 = por %p124, %p125
    %p128 = scmp.ne.s32.totalorder %s113, %s127
    %p129 = scmp.eq.s32.totalorder %s19, 0
    %p130 = por %p128, %p129
    %s132 = sadd.s32 %s131, 1
    %p135 = scmp.eq.s32.totalorder %s13, 1
    %p136 = scmp.ne.s32.totalorder %s131, %s133
    %p137 = scmp.eq.s32.totalorder %s13, 0
    %p138 = por %p136, %p137
    %p139 = scmp.ne.s32.totalorder %s131, %s133
    %p140 = scmp.eq.s32.totalorder %s18, 1
    %p141 = por %p139, %p140
    %p142 = scmp.ne.s32.totalorder %s133, %s134
    %p143 = scmp.eq.s32.totalorder %s18, 0
    %p144 = por %p142, %p143
    %p145 = scmp.ne.s32.totalorder %s133, %s134
    %p146 = scmp.eq.s32.totalorder %s19, 1
    %p147 = por %p145, %p146
    %p149 = scmp.ne.s32.totalorder %s134, %s148
    %p150 = scmp.eq.s32.totalorder %s19, 0
    %p151 = por %p149, %p150
    %s153 = sadd.s32 %s152, 1
    %p156 = scmp.eq.s32.totalorder %s13, 1
    %p157 = scmp.ne.s32.totalorder %s152, %s154
    %p158 = scmp.eq.s32.totalorder %s13, 0
    %p159 = por %p157, %p158
    %p160 = scmp.ne.s32.totalorder %s152, %s154
    %p161 = scmp.eq.s32.totalorder %s18, 1
    %p162 = por %p160, %p161
    %p163 = scmp.ne.s32.totalorder %s154, %s155
    %p164 = scmp.eq.s32.totalorder %s18, 0
    %p165 = por %p163, %p164
    %p166 = scmp.ne.s32.totalorder %s154, %s155
    %p167 = scmp.eq.s32.totalorder %s19, 1
    %p168 = por %p166, %p167
    %p170 = scmp.ne.s32.totalorder %s155, %s169
    %p171 = scmp.eq.s32.totalorder %s19, 0
    %p172 = por %p170, %p171
    %s173 = ssub.s32 %s13, %s20
    %p174 = scmp.eq.s32.totalorder %s173, 0
    %s176 = sadd.s32 %s175, 1
    %s177 = scalar_select %p174, %s175, %s176
    %p180 = pneg %p174
    %p181 = scmp.eq.s32.totalorder %s13, 1
    %p182 = por %p180, %p181
    %p183 = scmp.ne.s32.totalorder %s175, %s178
    %p184 = scmp.eq.s32.totalorder %s13, 0
    %p185 = por %p183, %p184
    %p186 = scmp.ne.s32.totalorder %s175, %s178
    %p187 = scmp.eq.s32.totalorder %s18, 1
    %p188 = por %p186, %p187
    %p189 = scmp.ne.s32.totalorder %s178, %s179
    %p190 = scmp.eq.s32.totalorder %s18, 0
    %p191 = por %p189, %p190
    %p192 = scmp.ne.s32.totalorder %s178, %s179
    %p193 = scmp.eq.s32.totalorder %s19, 1
    %p194 = por %p192, %p193
    %p196 = scmp.ne.s32.totalorder %s179, %s195
    %p197 = scmp.eq.s32.totalorder %s19, 0
    %p198 = por %p196, %p197
    %p199 = scmp.le.s32.totalorder 1, %s13
    %p200 = scmp.lt.s32.totalorder %s13, 3
    %p201 = pnand %p199, %p200
    %p202 = pneg %p201
    // Predicated region
    $region9: #{tpu_custom_call.1} parent=5 // pred_check
      _
    $region10: #{tpu_custom_call.1} parent=5 // pred_check_branch
      %204 = sbr.rel (%p201) target = $region12
    $region11: #{tpu_custom_call.1} parent=5 // pred_region
      %s205 = ssub.s32 %s13, 1
      // Predicated region
      $region13: #{tpu_custom_call.1} parent=11 // pred_check
        %p206 = pneg %p60
      $region14: #{tpu_custom_call.1} parent=11 // pred_check_branch
        %208 = sbr.rel (%p206) target = $region16
      $region15: #{tpu_custom_call.1} parent=11 // pred_region
        _
      $region16: #{tpu_custom_call.1} parent=11 // pred_fallthru
        _
      // Predicated region
      $region17: #{tpu_custom_call.1} parent=11 // pred_check
        %p209 = pneg %p81
      $region18: #{tpu_custom_call.1} parent=11 // pred_check_branch
        %211 = sbr.rel (%p209) target = $region20
      $region19: #{tpu_custom_call.1} parent=11 // pred_region
        _
      $region20: #{tpu_custom_call.1} parent=11 // pred_fallthru
        _
      // Predicated region
      $region21: #{tpu_custom_call.1} parent=11 // pred_check
        %p212 = pneg %p102
      $region22: #{tpu_custom_call.1} parent=11 // pred_check_branch
        %214 = sbr.rel (%p212) target = $region24
      $region23: #{tpu_custom_call.1} parent=11 // pred_region
        _
      $region24: #{tpu_custom_call.1} parent=11 // pred_fallthru
        _
      // Predicated region
      $region25: #{tpu_custom_call.1} parent=11 // pred_check
        %p215 = pneg %p123
      $region26: #{tpu_custom_call.1} parent=11 // pred_check_branch
        %217 = sbr.rel (%p215) target = $region28
      $region27: #{tpu_custom_call.1} parent=11 // pred_region
        _
      $region28: #{tpu_custom_call.1} parent=11 // pred_fallthru
        _
      // Predicated region
      $region29: #{tpu_custom_call.1} parent=11 // pred_check
        %p218 = pneg %p144
      $region30: #{tpu_custom_call.1} parent=11 // pred_check_branch
        %220 = sbr.rel (%p218) target = $region32
      $region31: #{tpu_custom_call.1} parent=11 // pred_region
        _
      $region32: #{tpu_custom_call.1} parent=11 // pred_fallthru
        _
      // Predicated region
      $region33: #{tpu_custom_call.1} parent=11 // pred_check
        %p221 = pneg %p165
      $region34: #{tpu_custom_call.1} parent=11 // pred_check_branch
        %223 = sbr.rel (%p221) target = $region36
      $region35: #{tpu_custom_call.1} parent=11 // pred_region
        _
      $region36: #{tpu_custom_call.1} parent=11 // pred_fallthru
        _
    $region12: #{tpu_custom_call.1} parent=5 // pred_fallthru
      _
    %p224 = scmp.lt.s32.totalorder %s13, 2
    // Predicated region
    $region37: #{tpu_custom_call.1} parent=5 // pred_check
      %p225 = pneg %p224
    $region38: #{tpu_custom_call.1} parent=5 // pred_check_branch
      %227 = sbr.rel (%p225) target = $region40
    $region39: #{tpu_custom_call.1} parent=5 // pred_region
      // Predicated region
      $region41: #{tpu_custom_call.1} parent=39 // pred_check
        %p228 = pneg %p33
      $region42: #{tpu_custom_call.1} parent=39 // pred_check_branch
        %230 = sbr.rel (%p228) target = $region44
      $region43: #{tpu_custom_call.1} parent=39 // pred_region
        %s231 = smul.u32 4, %s13
        %p232 = scmp.lt.s32.totalorder %s231, 7
        %s233 = scalar_select %p232, %s231, 7
        %s234 = smul.addr %s233, 8
        %s235 = scalar_lea.vmem %s0, %s234
        %s236 = smul.u32 4, %s13
      $region44: #{tpu_custom_call.1} parent=39 // pred_fallthru
        _
    $region40: #{tpu_custom_call.1} parent=5 // pred_fallthru
      _
    %p237 = scmp.le.s32.totalorder 1, %s13
    %p238 = scmp.lt.s32.totalorder %s13, 3
    %p239 = pnand %p237, %p238
    %p240 = pneg %p239
    // Predicated region
    $region45: #{tpu_custom_call.1} parent=5 // pred_check
      _
    $region46: #{tpu_custom_call.1} parent=5 // pred_check_branch
      %242 = sbr.rel (%p239) target = $region48
    $region47: #{tpu_custom_call.1} parent=5 // pred_region
      %s243 = ssub.s32 %s13, 1
      %s244 = smul.u32 4, %s18
      %p245 = scmp.lt.s32.totalorder %s244, 7
      %s246 = scalar_select %p245, %s244, 7
      %s247 = smul.addr %s246, 8
      %s248 = scalar_lea.vmem %s0, %s247
      %p249 = pneg %p39
      %p250 = pneg %p36
      %p251 = pneg %p60
      %p252 = pneg %p57
      %p253 = pneg %p81
      %p254 = pneg %p78
      %p255 = pneg %p102
      %p256 = pneg %p99
      %p257 = pneg %p123
      %p258 = pneg %p120
      %p259 = pneg %p144
      %p260 = pneg %p141
      %p261 = pneg %p165
      %p262 = pneg %p162
      %p263 = pneg %p191
      %p264 = pneg %p188
      %s265 = smul.u32 4, %s18
      %p266 = scmp.lt.s32.totalorder %s265, 7
      %s267 = scalar_select %p266, %s265, 7
      %s268 = smul.addr %s267, 8
      %s269 = scalar_lea.vmem %s7, %s268
      %s270 = smul.u32 4, %s18
      %p271 = scmp.lt.s32.totalorder %s270, 7
      %s272 = scalar_select %p271, %s270, 7
      %s273 = smul.addr %s272, 8
      %s274 = scalar_lea.vmem %s0, %s273
      %s275 = smul.u32 4, %s18
      %s276 = smul.u32 4, %s18
      %p277 = scmp.lt.s32.totalorder %s276, 7
      %s278 = scalar_select %p277, %s276, 7
      %s279 = smul.addr %s278, 8
      %s280 = scalar_lea.vmem %s7, %s279
      %s281 = smul.u32 4, %s18
      %v282 = vld [vmem:[%s274] sm:$0xff]
      %v283 = vld [vmem:[%s274 + $0x8] sm:$0xff]
      %v284 = vld [vmem:[%s274 + $0x10] sm:$0xff]
      %v285 = vld [vmem:[%s274 + $0x18] sm:$0xff]
      %v286 = vld [vmem:[%s1] sm:$0xff]
      %v287 = vld [vmem:[%s1 + $0x8] sm:$0xff]
      %v288 = vld [vmem:[%s2] sm:$0x1]
      %v290 = vperm.slane %v288, 0
      %vm292 = vcmask 130048
      %v294 = vsel %vm292, %v282, 0
      %v297 = vsel %vm292, %v283, 0
      %v300 = vsel %vm292, %v284, 0
      %v303 = vsel %vm292, %v285, 0
      %305 = vmatpush.msra.mxu0 0.0
      %306 = vmatpush.msra.mxu0 0.0
      %307 = vmatpush.msra.mxu0 0.0
      %308 = vmatpush.msra.mxu0 0.0
      %309 = vmatpush.msra.mxu0 0.0
      %310 = vmatpush.msra.mxu0 0.0
      %311 = vmatpush.msra.mxu0 0.0
      %312 = vmatpush.msra.mxu0 0.0
      %313 = vmatpush.msra.mxu0 0.0
      %314 = vmatpush.msra.mxu0 0.0
      %315 = vmatpush.msra.mxu0 0.0
      %316 = vmatpush.msra.mxu0 0.0
      %317 = vmatpush.msra.mxu0 0.0
      %318 = vmatpush.msra.mxu0 0.0
      %319 = vmatpush.msra.mxu0 %v287
      %320 = vmatpush.msra.mxu0 %v286
      %321 = vmatmul.f32.gmra.mxu0 %v294
      %v322 = vpop.f32.mrf.mxu0
      %v323 = vadd.f32 %v290, %v322
      %324 = vmatmul.f32.gmra.mxu0 %v297
      %v325 = vpop.f32.mrf.mxu0
      %v326 = vadd.f32 %v290, %v325
      %327 = vmatmul.f32.gmra.mxu0 %v300
      %v328 = vpop.f32.mrf.mxu0
      %v329 = vadd.f32 %v290, %v328
      %330 = vmatmul.f32.gmra.mxu0 %v303
      %v331 = vpop.f32.mrf.mxu0
      %v332 = vadd.f32 %v290, %v331
      %333 = vdwg.mxu0
      %v334 = vmax.f32 %v323, 0.0
      %v335 = vmax.f32 %v326, 0.0
      %v336 = vmax.f32 %v329, 0.0
      %v337 = vmax.f32 %v332, 0.0
      %v338 = vld [vmem:[%s3] sm:$0xff]
      %v339 = vld [vmem:[%s3 + $0x8] sm:$0xff]
      %v340 = vld [vmem:[%s3 + $0x10] sm:$0xff]
      %v341 = vld [vmem:[%s3 + $0x18] sm:$0xff]
      %v342 = vld [vmem:[%s3 + $0x20] sm:$0xff]
      %v343 = vld [vmem:[%s3 + $0x28] sm:$0xff]
      %v344 = vld [vmem:[%s3 + $0x30] sm:$0xff]
      %v345 = vld [vmem:[%s3 + $0x38] sm:$0xff]
      %v346 = vld [vmem:[%s3 + $0x40] sm:$0xff]
      %v347 = vld [vmem:[%s3 + $0x48] sm:$0xff]
      %v348 = vld [vmem:[%s3 + $0x50] sm:$0xff]
      %v349 = vld [vmem:[%s3 + $0x58] sm:$0xff]
      %v350 = vld [vmem:[%s3 + $0x60] sm:$0xff]
      %v351 = vld [vmem:[%s3 + $0x68] sm:$0xff]
      %v352 = vld [vmem:[%s3 + $0x70] sm:$0xff]
      %v353 = vld [vmem:[%s3 + $0x78] sm:$0xff]
      %v354 = vld [vmem:[%s4] sm:$0x1]
      %v356 = vperm.slane %v354, 0
      %358 = vmatpush.msra.mxu0 %v353
      %359 = vmatpush.msra.mxu0 %v352
      %360 = vmatpush.msra.mxu0 %v351
      %361 = vmatpush.msra.mxu0 %v350
      %362 = vmatpush.msra.mxu0 %v349
      %363 = vmatpush.msra.mxu0 %v348
      %364 = vmatpush.msra.mxu0 %v347
      %365 = vmatpush.msra.mxu0 %v346
      %366 = vmatpush.msra.mxu0 %v345
      %367 = vmatpush.msra.mxu0 %v344
      %368 = vmatpush.msra.mxu0 %v343
      %369 = vmatpush.msra.mxu0 %v342
      %370 = vmatpush.msra.mxu0 %v341
      %371 = vmatpush.msra.mxu0 %v340
      %372 = vmatpush.msra.mxu0 %v339
      %373 = vmatpush.msra.mxu0 %v338
      %374 = vmatmul.f32.gmra.mxu0 %v334
      %v375 = vpop.f32.mrf.mxu0
      %v376 = vadd.f32 %v356, %v375
      %377 = vmatmul.f32.gmra.mxu0 %v335
      %v378 = vpop.f32.mrf.mxu0
      %v379 = vadd.f32 %v356, %v378
      %380 = vmatmul.f32.gmra.mxu0 %v336
      %v381 = vpop.f32.mrf.mxu0
      %v382 = vadd.f32 %v356, %v381
      %383 = vmatmul.f32.gmra.mxu0 %v337
      %v384 = vpop.f32.mrf.mxu0
      %v385 = vadd.f32 %v356, %v384
      %386 = vdwg.mxu0
      %v387 = vmax.f32 %v376, 0.0
      %v388 = vmax.f32 %v379, 0.0
      %v389 = vmax.f32 %v382, 0.0
      %v390 = vmax.f32 %v385, 0.0
      %v391 = vld [vmem:[%s5] sm:$0xff]
      %v392 = vld [vmem:[%s5 + $0x8] sm:$0xff]
      %v393 = vld [vmem:[%s5 + $0x10] sm:$0xff]
      %v394 = vld [vmem:[%s5 + $0x18] sm:$0xff]
      %v395 = vld [vmem:[%s5 + $0x20] sm:$0xff]
      %v396 = vld [vmem:[%s5 + $0x28] sm:$0xff]
      %v397 = vld [vmem:[%s5 + $0x30] sm:$0xff]
      %v398 = vld [vmem:[%s5 + $0x38] sm:$0xff]
      %v399 = vld [vmem:[%s5 + $0x40] sm:$0xff]
      %v400 = vld [vmem:[%s5 + $0x48] sm:$0xff]
      %v401 = vld [vmem:[%s5 + $0x50] sm:$0xff]
      %v402 = vld [vmem:[%s5 + $0x58] sm:$0xff]
      %v403 = vld [vmem:[%s5 + $0x60] sm:$0xff]
      %v404 = vld [vmem:[%s5 + $0x68] sm:$0xff]
      %v405 = vld [vmem:[%s5 + $0x70] sm:$0xff]
      %v406 = vld [vmem:[%s5 + $0x78] sm:$0xff]
      %v407 = vld [vmem:[%s6] sm:$0x1]
      %v409 = vperm.slane %v407, 0
      %411 = vmatpush.msra.mxu0 %v406
      %412 = vmatpush.msra.mxu0 %v405
      %413 = vmatpush.msra.mxu0 %v404
      %414 = vmatpush.msra.mxu0 %v403
      %415 = vmatpush.msra.mxu0 %v402
      %416 = vmatpush.msra.mxu0 %v401
      %417 = vmatpush.msra.mxu0 %v400
      %418 = vmatpush.msra.mxu0 %v399
      %419 = vmatpush.msra.mxu0 %v398
      %420 = vmatpush.msra.mxu0 %v397
      %421 = vmatpush.msra.mxu0 %v396
      %422 = vmatpush.msra.mxu0 %v395
      %423 = vmatpush.msra.mxu0 %v394
      %424 = vmatpush.msra.mxu0 %v393
      %425 = vmatpush.msra.mxu0 %v392
      %426 = vmatpush.msra.mxu0 %v391
      %427 = vmatmul.f32.gmra.mxu0 %v387
      %v428 = vpop.f32.mrf.mxu0
      %v429 = vadd.f32 %v409, %v428
      %430 = vmatmul.f32.gmra.mxu0 %v388
      %v431 = vpop.f32.mrf.mxu0
      %v432 = vadd.f32 %v409, %v431
      %433 = vmatmul.f32.gmra.mxu0 %v389
      %v434 = vpop.f32.mrf.mxu0
      %v435 = vadd.f32 %v409, %v434
      %436 = vmatmul.f32.gmra.mxu0 %v390
      %v437 = vpop.f32.mrf.mxu0
      %v438 = vadd.f32 %v409, %v437
      %439 = vdwg.mxu0
      %440 = vst.msk [vmem:[%s280] sm:$0xff] %vm292, %v429
      %441 = vst.msk [vmem:[%s280 + $0x8] sm:$0xff] %vm292, %v432
      %442 = vst.msk [vmem:[%s280 + $0x10] sm:$0xff] %vm292, %v435
      %443 = vst.msk [vmem:[%s280 + $0x18] sm:$0xff] %vm292, %v438
      %s444 = smul.u32 4, %s18
      %p445 = scmp.lt.s32.totalorder %s444, 7
      %s446 = scalar_select %p445, %s444, 7
      %s447 = smul.addr %s446, 8
      %s448 = scalar_lea.vmem %s7, %s447
      // Predicated region
      $region49: #{tpu_custom_call.1} parent=47 // pred_check
        %p449 = pneg %p188
      $region50: #{tpu_custom_call.1} parent=47 // pred_check_branch
        %451 = sbr.rel (%p449) target = $region52
      $region51: #{tpu_custom_call.1} parent=47 // pred_region
        %s452 = smul.u32 4, %s18
      $region52: #{tpu_custom_call.1} parent=47 // pred_fallthru
        _
    $region48: #{tpu_custom_call.1} parent=5 // pred_fallthru
      _
    %p453 = scmp.le.s32.totalorder 2, %s13
    // Predicated region
    $region53: #{tpu_custom_call.1} parent=5 // pred_check
      %p454 = pneg %p453
    $region54: #{tpu_custom_call.1} parent=5 // pred_check_branch
      %456 = sbr.rel (%p454) target = $region56
    $region55: #{tpu_custom_call.1} parent=5 // pred_region
      %s457 = ssub.s32 %s13, 2
      // Predicated region
      $region57: #{tpu_custom_call.1} parent=55 // pred_check
        %p458 = pneg %p194
      $region58: #{tpu_custom_call.1} parent=55 // pred_check_branch
        %460 = sbr.rel (%p458) target = $region60
      $region59: #{tpu_custom_call.1} parent=55 // pred_region
        %s461 = smul.u32 4, %s19
        %p462 = scmp.lt.s32.totalorder %s461, 7
        %s463 = scalar_select %p462, %s461, 7
        %s464 = smul.addr %s463, 8
        %s465 = scalar_lea.vmem %s7, %s464
      $region60: #{tpu_custom_call.1} parent=55 // pred_fallthru
        _
    $region56: #{tpu_custom_call.1} parent=5 // pred_fallthru
      _
  $region6: #{tpu_custom_call.1} parent=0 // loop_footer
    %s17 = sadd.s32 1, %s13
  $region7: #{tpu_custom_call.1} parent=0 // loop_footer_branch
    %12 = sbr.rel target = $region3
  $region8: #{tpu_custom_call.1} parent=0 // loop_exit
    _

</llo_original>
